<compile_context>
chip_gen: v6e
topology: v6e:2x2x1
jax: 0.10.0
libtpu: 0.0.40
codegen_flags: <defaults>
</compile_context>

<pallas_src>
import functools

import numpy as np
import jax
import jax.numpy as jnp
from jax import lax
from jax.experimental import pallas as pl
from jax.experimental.pallas import tpu as pltpu


def _round_up(x, m):
    return ((x + m - 1) // m) * m


# ----------------------------------------------------------------------------
# Kernel 1: tiled SQUARED pairwise-distance matrix
#   d2[i, j] = max(|xi|^2 + |xj|^2 - 2 <xi, xj>, 0)
# ----------------------------------------------------------------------------
def _pdist_sq_kernel(xi_ref, et_ref, ni_ref, nj_ref, d_ref):
    # Gram tile on the MXU, canonical (M,K)x(K,N) layout (column operand is E^T,
    # so no transposed-RHS / XLU relayout path), f32 accumulation.
    prod = lax.dot_general(
        xi_ref[...], et_ref[...],
        dimension_numbers=(((1,), (0,)), ((), ())),
        preferred_element_type=jnp.float32,
    )
    # Precomputed squared norms broadcast: (tm,1) + (1,tn).
    res = ni_ref[...] + nj_ref[...] - 2.0 * prod
    # Squared distances only (no sqrt -> no EUP work); all downstream use is
    # monotone comparisons and the loss kernel recomputes exact distances.
    d_ref[...] = jnp.maximum(res, 0.0)


def pdist_sq(E, tile=None):
    """Padded squared pairwise distances. Returns (d_sq[n_pad, n_pad], n_pad)."""
    n, d = E.shape
    if tile is None:
        tile = 512 if n >= 1024 else (256 if n >= 512 else 128)
    n_pad = _round_up(n, tile)
    d_pad = _round_up(d, 128)                             # lane-aligned contraction dim

    E_p = jnp.pad(E.astype(jnp.float32), ((0, n_pad - n), (0, d_pad - d)))
    E_t = E_p.T                                           # (d_pad, n_pad) column operand
    sq = jnp.sum(E_p * E_p, axis=1)                       # O(n*D), fused by XLA
    sq_col = sq[:, None]                                  # (n_pad, 1)
    sq_row = sq[None, :]                                  # (1, n_pad)

    # VMEM budget for the resident-column-operand (1-D grid) variant:
    # double-buffered row strip + resident E^T + (tile, n_pad) output strip.
    strip_bytes = (2 * tile * d_pad + 2 * d_pad * n_pad
                   + 2 * tile * n_pad + 2 * (tile + n_pad)) * 4

    if strip_bytes <= 24 * 1024 * 1024:
        # 1-D grid over row strips; E^T and |xj|^2 have constant block index, so
        # they are fetched once and stay VMEM-resident (no HBM re-streaming).
        dm = pl.pallas_call(
            _pdist_sq_kernel,
            out_shape=jax.ShapeDtypeStruct((n_pad, n_pad), jnp.float32),
            grid_spec=pltpu.PrefetchScalarGridSpec(
                num_scalar_prefetch=0,
                grid=(n_pad // tile,),
                in_specs=[
                    pl.BlockSpec((tile, d_pad), lambda i: (i, 0)),    # row strip of E
                    pl.BlockSpec((d_pad, n_pad), lambda i: (0, 0)),   # resident E^T
                    pl.BlockSpec((tile, 1), lambda i: (i, 0)),        # |xi|^2
                    pl.BlockSpec((1, n_pad), lambda i: (0, 0)),       # |xj|^2 (resident)
                ],
                out_specs=pl.BlockSpec((tile, n_pad), lambda i: (i, 0)),
            ),
            compiler_params=pltpu.CompilerParams(
                dimension_semantics=("parallel",),
                vmem_limit_bytes=32 * 1024 * 1024),
            cost_estimate=pl.CostEstimate(
                flops=2 * n_pad * n_pad * d_pad,
                transcendentals=0,
                bytes_accessed=2 * n_pad * d_pad * 4 + 2 * n_pad * 4
                               + n_pad * n_pad * 4),
        )(E_p, E_t, sq_col, sq_row)
    else:
        # 2-D tiled fallback for large n*D (VMEM-gated); column operand is
        # re-streamed once per row tile (reflected in cost_estimate).
        gi = n_pad // tile
        dm = pl.pallas_call(
            _pdist_sq_kernel,
            out_shape=jax.ShapeDtypeStruct((n_pad, n_pad), jnp.float32),
            grid_spec=pltpu.PrefetchScalarGridSpec(
                num_scalar_prefetch=0,
                grid=(gi, gi),
                in_specs=[
                    pl.BlockSpec((tile, d_pad), lambda i, j: (i, 0)),  # row tile of E
                    pl.BlockSpec((d_pad, tile), lambda i, j: (0, j)),  # col tile of E^T
                    pl.BlockSpec((tile, 1), lambda i, j: (i, 0)),      # |xi|^2
                    pl.BlockSpec((1, tile), lambda i, j: (0, j)),      # |xj|^2
                ],
                out_specs=pl.BlockSpec((tile, tile), lambda i, j: (i, j)),
            ),
            compiler_params=pltpu.CompilerParams(
                dimension_semantics=("parallel", "parallel"),          # megacore on v7x
                vmem_limit_bytes=32 * 1024 * 1024),
            cost_estimate=pl.CostEstimate(
                flops=2 * n_pad * n_pad * d_pad,
                transcendentals=0,
                bytes_accessed=n_pad * d_pad * 4            # row operand (one pass)
                               + gi * n_pad * d_pad * 4     # re-streamed column operand
                               + 2 * n_pad * 4
                               + n_pad * n_pad * 4),
        )(E_p, E_t, sq_col, sq_row)
    return dm, n_pad


# ----------------------------------------------------------------------------
# Kernel 2: margin loss over sampled triplets (gridded reduction over rows)
#   d_ap = sqrt(sum((p-a)^2)+1e-8), d_an = sqrt(sum((n-a)^2)+1e-8)
#   pos_loss = relu(d_ap - beta + margin), neg_loss = relu(beta - d_an + margin)
#   outputs: sum(pos_loss+neg_loss), count(pos_loss>0 or neg_loss>0)
# ----------------------------------------------------------------------------
def _margin_loss_kernel(a_ref, p_ref, n_ref, beta_ref, loss_ref, cnt_ref,
                        *, margin, num_rows, block_rows):
    step = pl.program_id(0)

    @pl.when(step == 0)
    def _():
        loss_ref[...] = jnp.zeros_like(loss_ref)
        cnt_ref[...] = jnp.zeros_like(cnt_ref)

    a = a_ref[...]                          # (block_rows, D_pad), zero-padded lanes
    p = p_ref[...]
    ng = n_ref[...]
    beta = beta_ref[0]                      # scalar from SMEM

    # Validity mask built in-kernel (no lane-sparse mask input).
    row = step * block_rows + lax.broadcasted_iota(jnp.int32, (block_rows, 1), 0)
    mask = (row < num_rows).astype(jnp.float32)

    # Zero padding of the feature dim contributes 0 to the squared sums -> exact.
    d_ap = jnp.sqrt(jnp.sum((p - a) ** 2, axis=1, keepdims=True) + 1e-8)   # (B,1)
    d_an = jnp.sqrt(jnp.sum((ng - a) ** 2, axis=1, keepdims=True) + 1e-8)  # (B,1)

    pos_loss = jnp.maximum(d_ap - beta + margin, 0.0) * mask
    neg_loss = jnp.maximum(beta - d_an + margin, 0.0) * mask
    active = jnp.logical_or(pos_loss > 0.0, neg_loss > 0.0).astype(jnp.float32)

    loss_ref[...] += jnp.sum(pos_loss + neg_loss, axis=0, keepdims=True)   # (1,1)
    cnt_ref[...] += jnp.sum(active, axis=0, keepdims=True)                 # (1,1)


def _margin_loss_pallas(anchors, positives, negatives, beta, margin):
    P, D = anchors.shape
    D_pad = _round_up(D, 128)                            # full-width lanes

    # Single grid step when the (zero-padded, double-buffered) triplet tensors
    # fit VMEM comfortably (safe on all of v5e/v6e/v7x); otherwise tile rows.
    P8 = _round_up(max(P, 1), 8)
    if 3 * P8 * D_pad * 4 * 2 <= 8 * 1024 * 1024:
        block_rows = P8
    else:
        block_rows = 512
    P_pad = _round_up(max(P, 1), block_rows)

    def pad2(x):
        return jnp.pad(x.astype(jnp.float32), ((0, P_pad - P), (0, D_pad - D)))

    # class_specific_beta=False -> scalar beta, kept in SMEM.
    beta1 = jnp.reshape(beta.astype(jnp.float32), (1,))

    kernel = functools.partial(_margin_loss_kernel, margin=margin,
                               num_rows=P, block_rows=block_rows)
    loss_sum, pair_cnt = pl.pallas_call(
        kernel,
        out_shape=(jax.ShapeDtypeStruct((1, 1), jnp.float32),
                   jax.ShapeDtypeStruct((1, 1), jnp.float32)),
        grid_spec=pltpu.PrefetchScalarGridSpec(
            num_scalar_prefetch=0,
            grid=(P_pad // block_rows,),
            in_specs=[
                pl.BlockSpec((block_rows, D_pad), lambda i: (i, 0)),   # anchors
                pl.BlockSpec((block_rows, D_pad), lambda i: (i, 0)),   # positives
                pl.BlockSpec((block_rows, D_pad), lambda i: (i, 0)),   # negatives
                pl.BlockSpec(memory_space=pltpu.MemorySpace.SMEM),     # beta scalar
            ],
            out_specs=(pl.BlockSpec((1, 1), lambda i: (0, 0)),
                       pl.BlockSpec((1, 1), lambda i: (0, 0))),
        ),
        compiler_params=pltpu.CompilerParams(
            dimension_semantics=("arbitrary",)),                       # reduction axis
    )(pad2(anchors), pad2(positives), pad2(negatives), beta1)
    return loss_sum[0, 0], pair_cnt[0, 0]


# ----------------------------------------------------------------------------
# Sampler glue (index bookkeeping) — plain JAX, static shapes.
# Assumes a balanced batch (consecutive samples_per_class rows share a class),
# the same regime the PyTorch code relies on to avoid its truncation branch.
# Works directly on the padded squared-distance matrix (no [:n,:n] slice copy);
# padded columns are excluded via the validity mask.
# ----------------------------------------------------------------------------
def sampler(E, T, num_neg, cutoff=0.5, infinity=1e6):
    n = E.shape[0]
    if num_neg < 1:
        # TODO(synk): degenerate num_neg==0 warning/truncation path of the torch
        # Sampler (unbalanced clusters) is not implemented.
        raise ValueError("num_neg must be >= 1 (need >= 2 samples per class)")

    d_sq, n_pad = pdist_sq(E)                             # Pallas kernel, padded
    ar = jnp.arange(n_pad, dtype=jnp.int32)
    valid = ar < n                                        # real (non-pad) columns/rows
    T_pad = jnp.pad(T.astype(jnp.int32), (0, n_pad - n))

    same = (T_pad[:, None] == T_pad[None, :]) & valid[:, None] & valid[None, :]
    pos_mask = same & (ar[:, None] != ar[None, :])        # torch: pos > 0

    # positives: first num_neg same-class (non-self) column indices per row,
    # in increasing index order (== torch .nonzero() ordering).
    pos_keys = jnp.where(pos_mask, ar[None, :], n_pad + ar[None, :]).astype(jnp.int32)
    _, p_cols = lax.top_k(-pos_keys, num_neg)             # ascending col index
    p_idx = p_cols[:n].reshape(-1)

    # negatives: num_neg closest columns with d >= cutoff (i.e. d^2 >= cutoff^2)
    # and not positive/self/pad, re-sorted into increasing index order
    # (== torch scatter + nonzero). Squared distances preserve the ordering.
    banned = pos_mask | (d_sq < cutoff * cutoff) | (~valid)[None, :]
    masked = d_sq + infinity * banned.astype(d_sq.dtype)
    _, neg_cols = lax.top_k(-masked, num_neg)             # num_neg smallest d^2
    neg_cols = jnp.sort(neg_cols, axis=1)
    n_idx = neg_cols[:n].reshape(-1)

    a_idx = jnp.repeat(jnp.arange(n, dtype=jnp.int32), num_neg)
    return a_idx, E[a_idx], E[p_idx], E[n_idx]


# ----------------------------------------------------------------------------
# MarginLoss.forward  (class_specific_beta=False, beta=1.2, margin=0.2, nu=0.0)
# ----------------------------------------------------------------------------
def margin_loss_forward(E, T, beta_param, num_neg, margin=0.2, nu=0.0):
    a_idx, anchors, positives, negatives = sampler(E, T, num_neg)
    # TODO(synk): class_specific_beta=True (per-anchor beta = beta[T[a_idx]]) is
    # not wired into the kernel; only the default scalar-beta path is implemented.
    beta_regularization_loss = jnp.sum(jnp.abs(beta_param)) * nu   # torch.norm(beta, 1) * nu
    loss_sum, pair_cnt = _margin_loss_pallas(
        anchors, positives, negatives, beta_param, margin)
    loss = jnp.where(
        pair_cnt > 0.0,
        (loss_sum + beta_regularization_loss) / pair_cnt,
        loss_sum,                                          # reference leaves sum un-normalized
    )
    return loss


if __name__ == "__main__":
    key = jax.random.PRNGKey(0)

    nb_classes = 4
    samples_per_class = 4
    n = nb_classes * samples_per_class          # batch = 16
    D = 32                                      # embed_dim

    E = jax.random.normal(key, (n, D), dtype=jnp.float32)
    T_np = np.repeat(np.arange(nb_classes), samples_per_class).astype(np.int32)
    T = jnp.asarray(T_np)

    # num_neg = int(pos.sum()) // len(pos), computed host-side (static shape)
    num_neg = (int((T_np[:, None] == T_np[None, :]).sum()) - n) // n

    # Parameter init: class_specific_beta=False -> beta = tensor([1.2])
    beta_param = jnp.array([1.2], dtype=jnp.float32)

    loss = margin_loss_forward(E, T, beta_param, num_neg, margin=0.2, nu=0.0)
    jax.block_until_ready(loss)
    print("KERNEL_OK")
</pallas_src>

<mosaic_0001>
module attributes {stable_mosaic.version = 11 : i64} {
  func.func @_pdist_sq_kernel(%arg0: i32, %arg1: memref<128x128xf32, #tpu.memory_space<vmem>>, %arg2: memref<128x128xf32, #tpu.memory_space<vmem>>, %arg3: memref<128x1xf32, #tpu.memory_space<vmem>>, %arg4: memref<1x128xf32, #tpu.memory_space<vmem>>, %arg5: memref<128x128xf32, #tpu.memory_space<vmem>>) attributes {dimension_semantics = [#tpu.dimension_semantics<parallel>], iteration_bounds = array<i64: 1>, scalar_prefetch = 0 : i64, scratch_operands = 0 : i64, tpu.core_type = #tpu.core_type<tc>, window_params = [{transform_indices = @transform_0, window_bounds = array<i64: 128, 128>}, {pipeline_mode = #tpu.pipeline_mode<synchronous>, transform_indices = @transform_1, window_bounds = array<i64: 128, 128>}, {transform_indices = @transform_2, window_bounds = array<i64: 128, 1>}, {pipeline_mode = #tpu.pipeline_mode<synchronous>, transform_indices = @transform_3, window_bounds = array<i64: 1, 128>}, {transform_indices = @transform_4, window_bounds = array<i64: 128, 128>}]} {
    %c0 = arith.constant 0 : index
    %c0_0 = arith.constant 0 : index
    %0 = vector.load %arg1[%c0, %c0_0] : memref<128x128xf32, #tpu.memory_space<vmem>>, vector<128x128xf32>
    %c0_1 = arith.constant 0 : index
    %c0_2 = arith.constant 0 : index
    %1 = vector.load %arg2[%c0_1, %c0_2] : memref<128x128xf32, #tpu.memory_space<vmem>>, vector<128x128xf32>
    %cst = arith.constant dense<0.000000e+00> : vector<128x128xf32>
    %2 = tpu.matmul %0, %1, %cst {dimension_numbers = #tpu.dot_dimension_numbers<[1], [0], [0], [1], [0, 0, 1, 1], [], []>} : vector<128x128xf32>, vector<128x128xf32>, vector<128x128xf32> -> vector<128x128xf32>
    %c0_3 = arith.constant 0 : index
    %c0_4 = arith.constant 0 : index
    %3 = vector.load %arg3[%c0_3, %c0_4] : memref<128x1xf32, #tpu.memory_space<vmem>>, vector<128x1xf32>
    %c0_5 = arith.constant 0 : index
    %c0_6 = arith.constant 0 : index
    %4 = vector.load %arg4[%c0_5, %c0_6] : memref<1x128xf32, #tpu.memory_space<vmem>>, vector<1x128xf32>
    %5 = vector.broadcast %3 : vector<128x1xf32> to vector<128x128xf32>
    %6 = vector.broadcast %4 : vector<1x128xf32> to vector<128x128xf32>
    %7 = arith.addf %5, %6 : vector<128x128xf32>
    %cst_7 = arith.constant 2.000000e+00 : f32
    %8 = vector.broadcast %cst_7 : f32 to vector<128x128xf32>
    %9 = arith.mulf %8, %2 : vector<128x128xf32>
    %10 = arith.subf %7, %9 : vector<128x128xf32>
    %cst_8 = arith.constant 0.000000e+00 : f32
    %11 = vector.broadcast %cst_8 : f32 to vector<128x128xf32>
    %12 = arith.maximumf %10, %11 : vector<128x128xf32>
    %c0_9 = arith.constant 0 : index
    %c0_10 = arith.constant 0 : index
    %13 = vector.load %arg5[%c0_9, %c0_10] : memref<128x128xf32, #tpu.memory_space<vmem>>, vector<128x128xf32>
    tpu.vector_store %arg5[%c0_9, %c0_10], %12 {strides = array<i32>} : memref<128x128xf32, #tpu.memory_space<vmem>>, vector<128x128xf32>,
    return
  }
  func.func @transform_0(%arg0: i32) -> (i32, i32) {
    %c0_i32 = arith.constant 0 : i32
    %c0_i32_0 = arith.constant 0 : i32
    return %arg0, %c0_i32 : i32, i32
  }
  func.func @transform_1(%arg0: i32) -> (i32, i32) {
    %c0_i32 = arith.constant 0 : i32
    %c0_i32_0 = arith.constant 0 : i32
    %c0_i32_1 = arith.constant 0 : i32
    return %c0_i32, %c0_i32_0 : i32, i32
  }
  func.func @transform_2(%arg0: i32) -> (i32, i32) {
    %c0_i32 = arith.constant 0 : i32
    %c0_i32_0 = arith.constant 0 : i32
    return %arg0, %c0_i32 : i32, i32
  }
  func.func @transform_3(%arg0: i32) -> (i32, i32) {
    %c0_i32 = arith.constant 0 : i32
    %c0_i32_0 = arith.constant 0 : i32
    %c0_i32_1 = arith.constant 0 : i32
    return %c0_i32, %c0_i32_0 : i32, i32
  }
  func.func @transform_4(%arg0: i32) -> (i32, i32) {
    %c0_i32 = arith.constant 0 : i32
    %c0_i32_0 = arith.constant 0 : i32
    return %arg0, %c0_i32 : i32, i32
  }
}

</mosaic_0001>

<llo_original>
// kernel: tpu_custom_call.1
$region0: #{tpu_custom_call.1}
  #allocation0 [shape = 'u32[]', space=smem, size = 0x4, offset = 0x4, fixed_abs, tag = 'smem constant byte address 0x4 - core index']
  #allocation1 [shape = 'u32[144,128]{1,0:T(1,128)}', space=vmem, size = 0x12000, scoped, tag = 'internal scratch']
  %s0 = inlined_call_operand.vmem [shape: f32[128,128], index: 0, kind: input, shape index: {}]
  %s1 = inlined_call_operand.hbm [shape: f32[128,128], index: 1, kind: input, shape index: {}]
  %s2 = inlined_call_operand.vmem [shape: f32[128,1], index: 2, kind: input, shape index: {}]
  %s3 = inlined_call_operand.vmem [shape: f32[1,128], index: 3, kind: input, shape index: {}]
  %s4 = inlined_call_operand.hbm [shape: f32[128,128], index: 4, kind: output, shape index: {}]
  %s5 = sld [smem:[#allocation0]]
  $region30: #{tpu_custom_call.1} parent=0
    _
  %s7 = ssub.s32 1, %s5
  %s8 = scalar_select 0, %s7, %s5
  $region1: #{tpu_custom_call.1} parent=0
    #allocation2 [shape = 'u8[65536]{0}', space=vmem, size = 0x10000, scoped, tag = 'input window, operand 1, single buffered']
    #allocation3 [shape = 's32[1]{0}', space=sflag, size = 0x4, scoped, tag = 'scoped memory for tpu_custom_call.1']
    #allocation4 [shape = 's32[1]{0}', space=sflag, size = 0x4, scoped, tag = 'scoped memory for tpu_custom_call.1']
    #allocation5 [shape = 'u8[65536]{0}', space=vmem, size = 0x10000, scoped, tag = 'output window, operand 0, single buffered']
    %9 = vsyncpa [#allocation3], 0
    %10 = vsyncpa [#allocation4], 0
    // Predicated region
    $region2: #{tpu_custom_call.1} parent=1 // pred_check
      _
    $region3: #{tpu_custom_call.1} parent=1 // pred_check_branch
      %12 = sbr.rel (0) target = $region5
    $region4: #{tpu_custom_call.1} parent=1 // pred_region
      _
    $region5: #{tpu_custom_call.1} parent=1 // pred_fallthru
      _
    // Predicated region
    $region6: #{tpu_custom_call.1} parent=1 // pred_check
      _
    $region7: #{tpu_custom_call.1} parent=1 // pred_check_branch
      %14 = sbr.rel (0) target = $region9
    $region8: #{tpu_custom_call.1} parent=1 // pred_region
      %s16 = ssub.s32 2048, 2048
      %17 = vsyncadd [#allocation3], %s16
      %s18 = sshll.u32 [#allocation2], 4
      %s19 = int_to_ptr.vmem [resolvable:$true] %s18
      %24 = dma.hbm_to_vmem [thread:$0]  %s1, 2048, %s19, [#allocation3], 128, 128, 8
    $region9: #{tpu_custom_call.1} parent=1 // pred_fallthru
      _
    // Predicated region
    $region10: #{tpu_custom_call.1} parent=1 // pred_check
      _
    $region11: #{tpu_custom_call.1} parent=1 // pred_check_branch
      %26 = sbr.rel (0) target = $region13
    $region12: #{tpu_custom_call.1} parent=1 // pred_region
      _
    $region13: #{tpu_custom_call.1} parent=1 // pred_fallthru
      _
    // Predicated region
    $region14: #{tpu_custom_call.1} parent=1 // pred_check
      _
    $region15: #{tpu_custom_call.1} parent=1 // pred_check_branch
      %28 = sbr.rel (0) target = $region17
    $region16: #{tpu_custom_call.1} parent=1 // pred_region
      _
    $region17: #{tpu_custom_call.1} parent=1 // pred_fallthru
      _
    // Predicated region
    $region18: #{tpu_custom_call.1} parent=1 // pred_check
      _
    $region19: #{tpu_custom_call.1} parent=1 // pred_check_branch
      %30 = sbr.rel (0) target = $region21
    $region20: #{tpu_custom_call.1} parent=1 // pred_region
      %31 = dma.done [#allocation3], 2048
    $region21: #{tpu_custom_call.1} parent=1 // pred_fallthru
      _
    %v32 = vld [vmem:[%s0] sm:$0xff]
    %v33 = vld [vmem:[%s0 + $0x8] sm:$0xff]
    %v34 = vld [vmem:[%s0 + $0x10] sm:$0xff]
    %v35 = vld [vmem:[%s0 + $0x18] sm:$0xff]
    %v36 = vld [vmem:[%s0 + $0x20] sm:$0xff]
    %v37 = vld [vmem:[%s0 + $0x28] sm:$0xff]
    %v38 = vld [vmem:[%s0 + $0x30] sm:$0xff]
    %v39 = vld [vmem:[%s0 + $0x38] sm:$0xff]
    %v40 = vld [vmem:[%s0 + $0x40] sm:$0xff]
    %v41 = vld [vmem:[%s0 + $0x48] sm:$0xff]
    %v42 = vld [vmem:[%s0 + $0x50] sm:$0xff]
    %v43 = vld [vmem:[%s0 + $0x58] sm:$0xff]
    %v44 = vld [vmem:[%s0 + $0x60] sm:$0xff]
    %v45 = vld [vmem:[%s0 + $0x68] sm:$0xff]
    %v46 = vld [vmem:[%s0 + $0x70] sm:$0xff]
    %v47 = vld [vmem:[%s0 + $0x78] sm:$0xff]
    %v48 = vld [vmem:[#allocation2] sm:$0xff]
    %v49 = vld [vmem:[#allocation2 + $0x8] sm:$0xff]
    %v50 = vld [vmem:[#allocation2 + $0x10] sm:$0xff]
    %v51 = vld [vmem:[#allocation2 + $0x18] sm:$0xff]
    %v52 = vld [vmem:[#allocation2 + $0x20] sm:$0xff]
    %v53 = vld [vmem:[#allocation2 + $0x28] sm:$0xff]
    %v54 = vld [vmem:[#allocation2 + $0x30] sm:$0xff]
    %v55 = vld [vmem:[#allocation2 + $0x38] sm:$0xff]
    %v56 = vld [vmem:[#allocation2 + $0x40] sm:$0xff]
    %v57 = vld [vmem:[#allocation2 + $0x48] sm:$0xff]
    %v58 = vld [vmem:[#allocation2 + $0x50] sm:$0xff]
    %v59 = vld [vmem:[#allocation2 + $0x58] sm:$0xff]
    %v60 = vld [vmem:[#allocation2 + $0x60] sm:$0xff]
    %v61 = vld [vmem:[#allocation2 + $0x68] sm:$0xff]
    %v62 = vld [vmem:[#allocation2 + $0x70] sm:$0xff]
    %v63 = vld [vmem:[#allocation2 + $0x78] sm:$0xff]
    %64 = vmatprep.subr.mxu0 0.0
    %65 = vmatpush1.msra.mxu0 %v63
    %66 = vmatprep.subr.mxu0 0.0
    %67 = vmatpush1.msra.mxu0 %v62
    %68 = vmatprep.subr.mxu0 0.0
    %69 = vmatpush1.msra.mxu0 %v61
    %70 = vmatprep.subr.mxu0 0.0
    %71 = vmatpush1.msra.mxu0 %v60
    %72 = vmatprep.subr.mxu0 0.0
    %73 = vmatpush1.msra.mxu0 %v59
    %74 = vmatprep.subr.mxu0 0.0
    %75 = vmatpush1.msra.mxu0 %v58
    %76 = vmatprep.subr.mxu0 0.0
    %77 = vmatpush1.msra.mxu0 %v57
    %78 = vmatprep.subr.mxu0 0.0
    %79 = vmatpush1.msra.mxu0 %v56
    %80 = vmatprep.subr.mxu0 0.0
    %81 = vmatpush1.msra.mxu0 %v55
    %82 = vmatprep.subr.mxu0 0.0
    %83 = vmatpush1.msra.mxu0 %v54
    %84 = vmatprep.subr.mxu0 0.0
    %85 = vmatpush1.msra.mxu0 %v53
    %86 = vmatprep.subr.mxu0 0.0
    %87 = vmatpush1.msra.mxu0 %v52
    %88 = vmatprep.subr.mxu0 0.0
    %89 = vmatpush1.msra.mxu0 %v51
    %90 = vmatprep.subr.mxu0 0.0
    %91 = vmatpush1.msra.mxu0 %v50
    %92 = vmatprep.subr.mxu0 0.0
    %93 = vmatpush1.msra.mxu0 %v49
    %94 = vmatprep.subr.mxu0 0.0
    %95 = vmatpush1.msra.mxu0 %v48
    %96 = vmatprep.subr.mxu0 0.0
    %97 = vmatpush2.msra.mxu0 0.0
    %98 = vmatprep.subr.mxu0 0.0
    %99 = vmatpush2.msra.mxu0 0.0
    %100 = vmatprep.subr.mxu0 0.0
    %101 = vmatpush2.msra.mxu0 0.0
    %102 = vmatprep.subr.mxu0 0.0
    %103 = vmatpush2.msra.mxu0 0.0
    %104 = vmatprep.subr.mxu0 0.0
    %105 = vmatpush2.msra.mxu0 0.0
    %106 = vmatprep.subr.mxu0 0.0
    %107 = vmatpush2.msra.mxu0 0.0
    %108 = vmatprep.subr.mxu0 0.0
    %109 = vmatpush2.msra.mxu0 0.0
    %110 = vmatprep.subr.mxu0 0.0
    %111 = vmatpush2.msra.mxu0 0.0
    %112 = vmatprep.subr.mxu0 0.0
    %113 = vmatpush2.msra.mxu0 0.0
    %114 = vmatprep.subr.mxu0 0.0
    %115 = vmatpush2.msra.mxu0 0.0
    %116 = vmatprep.subr.mxu0 0.0
    %117 = vmatpush2.msra.mxu0 0.0
    %118 = vmatprep.subr.mxu0 0.0
    %119 = vmatpush2.msra.mxu0 0.0
    %120 = vmatprep.subr.mxu0 0.0
    %121 = vmatpush2.msra.mxu0 0.0
    %122 = vmatprep.subr.mxu0 0.0
    %123 = vmatpush2.msra.mxu0 0.0
    %124 = vmatprep.subr.mxu0 0.0
    %125 = vmatpush2.msra.mxu0 0.0
    %126 = vmatprep.subr.mxu0 0.0
    %127 = vmatpush2.msra.mxu0 0.0
    %128 = vmatprep.mubr.f32.mxu0 0.0
    %129 = vmatmul.mubr.f32.gmra.mxu0 %v32
    %v130 = vpop.f32.mrf.mxu0
    %v131 = vadd.f32 0.0, %v130
    %v132 = vpop.f32.mrf.mxu0
    %133 = vmatprep.mubr.f32.mxu0 0.0
    %134 = vmatmul.mubr.f32.gmra.mxu0 %v33
    %v135 = vpop.f32.mrf.mxu0
    %v136 = vadd.f32 0.0, %v135
    %v137 = vpop.f32.mrf.mxu0
    %138 = vmatprep.mubr.f32.mxu0 0.0
    %139 = vmatmul.mubr.f32.gmra.mxu0 %v34
    %v140 = vpop.f32.mrf.mxu0
    %v141 = vadd.f32 0.0, %v140
    %v142 = vpop.f32.mrf.mxu0
    %143 = vmatprep.mubr.f32.mxu0 0.0
    %144 = vmatmul.mubr.f32.gmra.mxu0 %v35
    %v145 = vpop.f32.mrf.mxu0
    %v146 = vadd.f32 0.0, %v145
    %v147 = vpop.f32.mrf.mxu0
    %148 = vmatprep.mubr.f32.mxu0 0.0
    %149 = vmatmul.mubr.f32.gmra.mxu0 %v36
    %v150 = vpop.f32.mrf.mxu0
    %v151 = vadd.f32 0.0, %v150
    %v152 = vpop.f32.mrf.mxu0
    %153 = vmatprep.mubr.f32.mxu0 0.0
    %154 = vmatmul.mubr.f32.gmra.mxu0 %v37
    %v155 = vpop.f32.mrf.mxu0
    %v156 = vadd.f32 0.0, %v155
    %v157 = vpop.f32.mrf.mxu0
    %158 = vmatprep.mubr.f32.mxu0 0.0
    %159 = vmatmul.mubr.f32.gmra.mxu0 %v38
    %v160 = vpop.f32.mrf.mxu0
    %v161 = vadd.f32 0.0, %v160
    %v162 = vpop.f32.mrf.mxu0
    %163 = vmatprep.mubr.f32.mxu0 0.0
    %164 = vmatmul.mubr.f32.gmra.mxu0 %v39
    %v165 = vpop.f32.mrf.mxu0
    %v166 = vadd.f32 0.0, %v165
    %v167 = vpop.f32.mrf.mxu0
    %168 = vmatprep.mubr.f32.mxu0 0.0
    %169 = vmatmul.mubr.f32.gmra.mxu0 %v40
    %v170 = vpop.f32.mrf.mxu0
    %v171 = vadd.f32 0.0, %v170
    %v172 = vpop.f32.mrf.mxu0
    %173 = vmatprep.mubr.f32.mxu0 0.0
    %174 = vmatmul.mubr.f32.gmra.mxu0 %v41
    %v175 = vpop.f32.mrf.mxu0
    %v176 = vadd.f32 0.0, %v175
    %v177 = vpop.f32.mrf.mxu0
    %178 = vmatprep.mubr.f32.mxu0 0.0
    %179 = vmatmul.mubr.f32.gmra.mxu0 %v42
    %v180 = vpop.f32.mrf.mxu0
    %v181 = vadd.f32 0.0, %v180
    %v182 = vpop.f32.mrf.mxu0
    %183 = vmatprep.mubr.f32.mxu0 0.0
    %184 = vmatmul.mubr.f32.gmra.mxu0 %v43
    %v185 = vpop.f32.mrf.mxu0
    %v186 = vadd.f32 0.0, %v185
    %v187 = vpop.f32.mrf.mxu0
    %188 = vmatprep.mubr.f32.mxu0 0.0
    %189 = vmatmul.mubr.f32.gmra.mxu0 %v44
    %v190 = vpop.f32.mrf.mxu0
    %v191 = vadd.f32 0.0, %v190
    %v192 = vpop.f32.mrf.mxu0
    %193 = vmatprep.mubr.f32.mxu0 0.0
    %194 = vmatmul.mubr.f32.gmra.mxu0 %v45
    %v195 = vpop.f32.mrf.mxu0
    %v196 = vadd.f32 0.0, %v195
    %v197 = vpop.f32.mrf.mxu0
    %198 = vmatprep.mubr.f32.mxu0 0.0
    %199 = vmatmul.mubr.f32.gmra.mxu0 %v46
    %v200 = vpop.f32.mrf.mxu0
    %v201 = vadd.f32 0.0, %v200
    %v202 = vpop.f32.mrf.mxu0
    %203 = vmatprep.mubr.f32.mxu0 0.0
    %204 = vmatmul.mubr.f32.gmra.mxu0 %v47
    %v205 = vpop.f32.mrf.mxu0
    %v206 = vadd.f32 0.0, %v205
    %v207 = vpop.f32.mrf.mxu0
    %208 = vdwg.mxu0
    %v209 = vld [vmem:[%s2] sm:$0xff]
    %v210 = vld [vmem:[%s2 + $0x8] sm:$0xff]
    %v211 = vld [vmem:[%s2 + $0x10] sm:$0xff]
    %v212 = vld [vmem:[%s2 + $0x18] sm:$0xff]
    %v213 = vld [vmem:[%s2 + $0x20] sm:$0xff]
    %v214 = vld [vmem:[%s2 + $0x28] sm:$0xff]
    %v215 = vld [vmem:[%s2 + $0x30] sm:$0xff]
    %v216 = vld [vmem:[%s2 + $0x38] sm:$0xff]
    %v217 = vld [vmem:[%s2 + $0x40] sm:$0xff]
    %v218 = vld [vmem:[%s2 + $0x48] sm:$0xff]
    %v219 = vld [vmem:[%s2 + $0x50] sm:$0xff]
    %v220 = vld [vmem:[%s2 + $0x58] sm:$0xff]
    %v221 = vld [vmem:[%s2 + $0x60] sm:$0xff]
    %v222 = vld [vmem:[%s2 + $0x68] sm:$0xff]
    %v223 = vld [vmem:[%s2 + $0x70] sm:$0xff]
    %v224 = vld [vmem:[%s2 + $0x78] sm:$0xff]
    %v225 = vld [vmem:[%s3] sm:$0x1]
    %227 = vset.pattern.permute.xlu0 0
    %228 = vperm.xlu0 %227, %v209
    %v229 = vpop.permute.xlu0 %228
    %232 = vset.pattern.permute.xlu0 0
    %233 = vperm.xlu0 %232, %v210
    %v234 = vpop.permute.xlu0 %233
    %237 = vset.pattern.permute.xlu0 0
    %238 = vperm.xlu0 %237, %v211
    %v239 = vpop.permute.xlu0 %238
    %242 = vset.pattern.permute.xlu0 0
    %243 = vperm.xlu0 %242, %v212
    %v244 = vpop.permute.xlu0 %243
    %247 = vset.pattern.permute.xlu0 0
    %248 = vperm.xlu0 %247, %v213
    %v249 = vpop.permute.xlu0 %248
    %252 = vset.pattern.permute.xlu0 0
    %253 = vperm.xlu0 %252, %v214
    %v254 = vpop.permute.xlu0 %253
    %257 = vset.pattern.permute.xlu0 0
    %258 = vperm.xlu0 %257, %v215
    %v259 = vpop.permute.xlu0 %258
    %262 = vset.pattern.permute.xlu0 0
    %263 = vperm.xlu0 %262, %v216
    %v264 = vpop.permute.xlu0 %263
    %267 = vset.pattern.permute.xlu0 0
    %268 = vperm.xlu0 %267, %v217
    %v269 = vpop.permute.xlu0 %268
    %272 = vset.pattern.permute.xlu0 0
    %273 = vperm.xlu0 %272, %v218
    %v274 = vpop.permute.xlu0 %273
    %277 = vset.pattern.permute.xlu0 0
    %278 = vperm.xlu0 %277, %v219
    %v279 = vpop.permute.xlu0 %278
    %282 = vset.pattern.permute.xlu0 0
    %283 = vperm.xlu0 %282, %v220
    %v284 = vpop.permute.xlu0 %283
    %287 = vset.pattern.permute.xlu0 0
    %288 = vperm.xlu0 %287, %v221
    %v289 = vpop.permute.xlu0 %288
    %292 = vset.pattern.permute.xlu0 0
    %293 = vperm.xlu0 %292, %v222
    %v294 = vpop.permute.xlu0 %293
    %297 = vset.pattern.permute.xlu0 0
    %298 = vperm.xlu0 %297, %v223
    %v299 = vpop.permute.xlu0 %298
    %302 = vset.pattern.permute.xlu0 0
    %303 = vperm.xlu0 %302, %v224
    %v304 = vpop.permute.xlu0 %303
    %v307 = vlaneseq
    %v308 = vshrl.u32 %v307, 7
    %v309 = vsub.s32 0, %v308
    %v310 = vrot.slane %v225, %v309
    %v312 = vadd.f32 %v229, %v310
    %v313 = vadd.f32 %v234, %v310
    %v314 = vadd.f32 %v239, %v310
    %v315 = vadd.f32 %v244, %v310
    %v316 = vadd.f32 %v249, %v310
    %v317 = vadd.f32 %v254, %v310
    %v318 = vadd.f32 %v259, %v310
    %v319 = vadd.f32 %v264, %v310
    %v320 = vadd.f32 %v269, %v310
    %v321 = vadd.f32 %v274, %v310
    %v322 = vadd.f32 %v279, %v310
    %v323 = vadd.f32 %v284, %v310
    %v324 = vadd.f32 %v289, %v310
    %v325 = vadd.f32 %v294, %v310
    %v326 = vadd.f32 %v299, %v310
    %v327 = vadd.f32 %v304, %v310
    %v328 = vmul.f32 %v131, 2.0
    %v329 = vmul.f32 %v136, 2.0
    %v330 = vmul.f32 %v141, 2.0
    %v331 = vmul.f32 %v146, 2.0
    %v332 = vmul.f32 %v151, 2.0
    %v333 = vmul.f32 %v156, 2.0
    %v334 = vmul.f32 %v161, 2.0
    %v335 = vmul.f32 %v166, 2.0
    %v336 = vmul.f32 %v171, 2.0
    %v337 = vmul.f32 %v176, 2.0
    %v338 = vmul.f32 %v181, 2.0
    %v339 = vmul.f32 %v186, 2.0
    %v340 = vmul.f32 %v191, 2.0
    %v341 = vmul.f32 %v196, 2.0
    %v342 = vmul.f32 %v201, 2.0
    %v343 = vmul.f32 %v206, 2.0
    %v344 = vsub.f32 %v312, %v328
    %v345 = vsub.f32 %v313, %v329
    %v346 = vsub.f32 %v314, %v330
    %v347 = vsub.f32 %v315, %v331
    %v348 = vsub.f32 %v316, %v332
    %v349 = vsub.f32 %v317, %v333
    %v350 = vsub.f32 %v318, %v334
    %v351 = vsub.f32 %v319, %v335
    %v352 = vsub.f32 %v320, %v336
    %v353 = vsub.f32 %v321, %v337
    %v354 = vsub.f32 %v322, %v338
    %v355 = vsub.f32 %v323, %v339
    %v356 = vsub.f32 %v324, %v340
    %v357 = vsub.f32 %v325, %v341
    %v358 = vsub.f32 %v326, %v342
    %v359 = vsub.f32 %v327, %v343
    %v360 = vmax.f32 %v344, 0.0
    %v361 = vmax.f32 %v345, 0.0
    %v362 = vmax.f32 %v346, 0.0
    %v363 = vmax.f32 %v347, 0.0
    %v364 = vmax.f32 %v348, 0.0
    %v365 = vmax.f32 %v349, 0.0
    %v366 = vmax.f32 %v350, 0.0
    %v367 = vmax.f32 %v351, 0.0
    %v368 = vmax.f32 %v352, 0.0
    %v369 = vmax.f32 %v353, 0.0
    %v370 = vmax.f32 %v354, 0.0
    %v371 = vmax.f32 %v355, 0.0
    %v372 = vmax.f32 %v356, 0.0
    %v373 = vmax.f32 %v357, 0.0
    %v374 = vmax.f32 %v358, 0.0
    %v375 = vmax.f32 %v359, 0.0
    %376 = vst [vmem:[#allocation5] sm:$0xff] %v360
    %377 = vst [vmem:[#allocation5 + $0x8] sm:$0xff] %v361
    %378 = vst [vmem:[#allocation5 + $0x10] sm:$0xff] %v362
    %379 = vst [vmem:[#allocation5 + $0x18] sm:$0xff] %v363
    %380 = vst [vmem:[#allocation5 + $0x20] sm:$0xff] %v364
    %381 = vst [vmem:[#allocation5 + $0x28] sm:$0xff] %v365
    %382 = vst [vmem:[#allocation5 + $0x30] sm:$0xff] %v366
    %383 = vst [vmem:[#allocation5 + $0x38] sm:$0xff] %v367
    %384 = vst [vmem:[#allocation5 + $0x40] sm:$0xff] %v368
    %385 = vst [vmem:[#allocation5 + $0x48] sm:$0xff] %v369
    %386 = vst [vmem:[#allocation5 + $0x50] sm:$0xff] %v370
    %387 = vst [vmem:[#allocation5 + $0x58] sm:$0xff] %v371
    %388 = vst [vmem:[#allocation5 + $0x60] sm:$0xff] %v372
    %389 = vst [vmem:[#allocation5 + $0x68] sm:$0xff] %v373
    %390 = vst [vmem:[#allocation5 + $0x70] sm:$0xff] %v374
    %391 = vst [vmem:[#allocation5 + $0x78] sm:$0xff] %v375
    // Predicated region
    $region22: #{tpu_custom_call.1} parent=1 // pred_check
      _
    $region23: #{tpu_custom_call.1} parent=1 // pred_check_branch
      %393 = sbr.rel (0) target = $region25
    $region24: #{tpu_custom_call.1} parent=1 // pred_region
      %s395 = ssub.s32 2048, 2048
      %396 = vsyncadd [#allocation4], %s395
      %s397 = sshll.u32 [#allocation5], 4
      %s398 = int_to_ptr.vmem [resolvable:$true] %s397
      %403 = dma.vmem_to_hbm [thread:$0]  %s398, 2048, %s4, [#allocation4], 128, 128, 8
    $region25: #{tpu_custom_call.1} parent=1 // pred_fallthru
      _
    // Predicated region
    $region26: #{tpu_custom_call.1} parent=1 // pred_check
      _
    $region27: #{tpu_custom_call.1} parent=1 // pred_check_branch
      %405 = sbr.rel (0) target = $region29
    $region28: #{tpu_custom_call.1} parent=1 // pred_region
      %406 = dma.done [#allocation4], 2048
    $region29: #{tpu_custom_call.1} parent=1 // pred_fallthru
      _
    %407 = vsyncpa [#allocation3], 1
    %408 = vsyncpa [#allocation4], 1

</llo_original>
